<compile_context>
chip_gen: v7x
topology: tpu7x:2x2x1
jax: 0.10.0
libtpu: 0.0.40
codegen_flags: <defaults>
</compile_context>

<pallas_src>
import jax
import jax.numpy as jnp
from jax.experimental import pallas as pl
from jax.experimental.pallas import tpu as pltpu

TN = 128               # lane tile (fixed)
TM = 2048              # rows per tiled block: 1 MiB f32 per input block
MIN_KERNEL_ROWS = 512  # below 512*128 = 65,536 elements use plain fused XLA
_SUBLANE = 32          # small-path blocks rounded to 32 rows: valid sublane
                       # multiple for every dtype down to 8-bit packing


def _num_tensorcores():
    """2 TensorCores per chip on v7x, 1 on v5e/v6e; defensive default = 1."""
    try:
        kind = jax.devices()[0].device_kind.lower()
    except Exception:
        return 1
    return 2 if ("v7" in kind or "tpu7" in kind) else 1


def _vmem_limit_bytes(block_rows, itemsizes, with_acc):
    """Scoped-VMEM limit from the real footprint: double-buffered input blocks
    (+ f32 accumulator), with ~50% margin; floor 16 MiB, cap 48 MiB so we never
    under-reserve on v5e nor hog v7x's 64 MiB per-TC VMEM."""
    need = 2 * block_rows * TN * sum(itemsizes)          # 2 buffers per input
    if with_acc:
        need += block_rows * TN * 4                      # f32 accumulator
    return int(min(max(need * 3 // 2, 16 << 20), 48 << 20))


# ---------------------------------------------------------------------------
# Kernels
# ---------------------------------------------------------------------------

def _sse_small_kernel(yhat_ref, y_ref, out_ref):
    """Single-block sum of squared differences (no grid carry)."""
    d = yhat_ref[...].astype(jnp.float32) - y_ref[...].astype(jnp.float32)
    out_ref[0, 0] = jnp.sum(d * d)


def _sse_tiled_kernel(yhat_ref, y_ref, out_ref, acc_ref):
    """Per-core partial SSE over row blocks.  No masking: every block the grid
    touches is fully in-bounds (the wrapper trims the region)."""
    i = pl.program_id(1)

    @pl.when(i == 0)
    def _():
        acc_ref[...] = jnp.zeros_like(acc_ref)

    d = yhat_ref[...].astype(jnp.float32) - y_ref[...].astype(jnp.float32)
    acc_ref[...] += d * d

    @pl.when(i == pl.num_programs(1) - 1)
    def _():
        out_ref[0, 0] = jnp.sum(acc_ref[...])


# ---------------------------------------------------------------------------
# pallas_call wrappers
# ---------------------------------------------------------------------------

def _sse_small(yhat_2d, y_2d, kernel_rows):
    """SSE over the first `kernel_rows` rows (single block)."""
    vmem = _vmem_limit_bytes(kernel_rows,
                             (yhat_2d.dtype.itemsize, y_2d.dtype.itemsize),
                             with_acc=False)
    out = pl.pallas_call(
        _sse_small_kernel,
        out_shape=jax.ShapeDtypeStruct((1, 1), jnp.float32),
        grid=(1,),
        in_specs=[
            pl.BlockSpec((kernel_rows, TN), lambda i: (0, 0)),
            pl.BlockSpec((kernel_rows, TN), lambda i: (0, 0)),
        ],
        out_specs=pl.BlockSpec((1, 1), lambda i: (0, 0),
                               memory_space=pltpu.SMEM),
        compiler_params=pltpu.CompilerParams(vmem_limit_bytes=vmem),
    )(yhat_2d, y_2d)
    return out[0, 0]


def _sse_tiled(yhat_2d, y_2d, nblocks, nc):
    """SSE over the first nblocks*TM rows (nblocks % nc == 0), nc partials."""
    bpc = nblocks // nc     # row blocks per core

    def in_map(c, i):
        return (c * bpc + i, 0)

    # Only CORE_PARALLEL changes codegen for per-core sharding (v7x, nc=2);
    # single-TC chips get nc=1 and a trivial leading axis.
    dims = (pltpu.CORE_PARALLEL if nc > 1 else pltpu.ARBITRARY, pltpu.ARBITRARY)
    vmem = _vmem_limit_bytes(TM,
                             (yhat_2d.dtype.itemsize, y_2d.dtype.itemsize),
                             with_acc=True)

    partials = pl.pallas_call(
        _sse_tiled_kernel,
        out_shape=jax.ShapeDtypeStruct((nc, 1), jnp.float32),
        grid_spec=pltpu.PrefetchScalarGridSpec(
            num_scalar_prefetch=0,
            grid=(nc, bpc),
            in_specs=[
                pl.BlockSpec((TM, TN), in_map),
                pl.BlockSpec((TM, TN), in_map),
            ],
            out_specs=pl.BlockSpec((1, 1), lambda c, i: (c, 0),
                                   memory_space=pltpu.SMEM),
            scratch_shapes=[pltpu.VMEM((TM, TN), jnp.float32)],
        ),
        compiler_params=pltpu.CompilerParams(
            dimension_semantics=dims,
            vmem_limit_bytes=vmem,
        ),
    )(yhat_2d, y_2d)
    return jnp.sum(partials)


# ---------------------------------------------------------------------------
# Public entry point: matches torch  sqrt(MSELoss()(yhat, y) + eps)
# ---------------------------------------------------------------------------

def rmse_loss(yhat, y, eps=1e-6):
    assert yhat.shape == y.shape, "yhat and y must have the same shape"
    n = yhat.size
    yhat_f = jnp.ravel(yhat)
    y_f = jnp.ravel(y)

    nc = _num_tensorcores()
    rows = n // TN          # number of full 128-lane rows

    # How many leading rows the Pallas kernel handles.  Everything past that
    # (remainder rows + <128-element tail, or the whole array when tiny) goes
    # through ONE fused subtract/square/reduce in plain JAX.
    if rows < MIN_KERNEL_ROWS:
        kernel_rows = 0                               # tiny: XLA is at roofline
        nblocks = 0
    elif rows < TM * nc:
        kernel_rows = (rows // _SUBLANE) * _SUBLANE   # single unmasked block
        nblocks = 0
    else:
        nblocks = (rows // (TM * nc)) * nc            # even per-core split
        kernel_rows = nblocks * TM

    n_kernel = kernel_rows * TN
    if n_kernel < n:
        dr = (yhat_f[n_kernel:].astype(jnp.float32)
              - y_f[n_kernel:].astype(jnp.float32))
        rest_sse = jnp.sum(dr * dr)
    else:
        rest_sse = jnp.float32(0.0)

    if kernel_rows == 0:
        sse = rest_sse
    else:
        # View the multiple-of-128 prefix as (rows, 128); the kernel only ever
        # reads the first kernel_rows rows, so no masking is needed in-kernel.
        n_main = rows * TN
        yhat_2d = (yhat_f if n_main == n else yhat_f[:n_main]).reshape(rows, TN)
        y_2d = (y_f if n_main == n else y_f[:n_main]).reshape(rows, TN)
        if nblocks > 0:
            sse = _sse_tiled(yhat_2d, y_2d, nblocks, nc) + rest_sse
        else:
            sse = _sse_small(yhat_2d, y_2d, kernel_rows) + rest_sse

    # Final mean + sqrt(. + eps): matches torch semantics (eps inside sqrt).
    return jnp.sqrt(sse / jnp.float32(n) + jnp.float32(eps))


if __name__ == "__main__":
    key = jax.random.PRNGKey(0)
    k1, k2, k3, k4, k5, k6, k7, k8 = jax.random.split(key, 8)

    def ref_rmse(a, b, eps=1e-6):
        d = a.astype(jnp.float32) - b.astype(jnp.float32)
        return jnp.sqrt(jnp.mean(d * d) + eps)

    # 1) Small NCHW input: tiny-input fallback (fused XLA, no kernel launch).
    yhat = jax.random.normal(k1, (2, 4, 16, 16), dtype=jnp.float32)
    y = jax.random.normal(k2, (2, 4, 16, 16), dtype=jnp.float32)
    out = rmse_loss(yhat, y)
    jax.block_until_ready(out)
    assert jnp.allclose(out, ref_rmse(yhat, y), rtol=1e-4, atol=1e-6), \
        (out, ref_rmse(yhat, y))

    # 2) Mid-size input with a <128-element tail: single-block kernel path.
    yhat2 = jax.random.normal(k3, (2, 8, 100, 101), dtype=jnp.float32)
    y2 = jax.random.normal(k4, (2, 8, 100, 101), dtype=jnp.float32)
    out2 = rmse_loss(yhat2, y2)
    jax.block_until_ready(out2)
    assert jnp.allclose(out2, ref_rmse(yhat2, y2), rtol=1e-4, atol=1e-6), \
        (out2, ref_rmse(yhat2, y2))

    # 3) Larger input: tiled kernel path (unmasked 2048x128 blocks) + jnp
    #    handling of the leftover rows.
    yhat3 = jax.random.normal(k5, (4, 8, 130, 128), dtype=jnp.float32)
    y3 = jax.random.normal(k6, (4, 8, 130, 128), dtype=jnp.float32)
    out3 = rmse_loss(yhat3, y3)
    jax.block_until_ready(out3)
    assert jnp.allclose(out3, ref_rmse(yhat3, y3), rtol=1e-4, atol=1e-6), \
        (out3, ref_rmse(yhat3, y3))

    # 4) bf16 inputs stream straight into the kernel (half the HBM bytes),
    #    f32 accumulation in-kernel.
    yhat4 = jax.random.normal(k7, (2, 8, 128, 100), dtype=jnp.float32).astype(jnp.bfloat16)
    y4 = jax.random.normal(k8, (2, 8, 128, 100), dtype=jnp.float32).astype(jnp.bfloat16)
    out4 = rmse_loss(yhat4, y4)
    jax.block_until_ready(out4)
    assert jnp.allclose(out4, ref_rmse(yhat4, y4), rtol=1e-3, atol=1e-4), \
        (out4, ref_rmse(yhat4, y4))

    print("KERNEL_OK")
</pallas_src>

<mosaic_0001>
module attributes {stable_mosaic.version = 11 : i64} {
  func.func @_sse_small_kernel(%arg0: i32, %arg1: memref<1248x128xf32, #tpu.memory_space<vmem>>, %arg2: memref<1248x128xf32, #tpu.memory_space<vmem>>, %arg3: memref<1x1xf32, #tpu.memory_space<smem>>) attributes {dimension_semantics = [#tpu.dimension_semantics<arbitrary>], iteration_bounds = array<i64: 1>, scalar_prefetch = 0 : i64, scratch_operands = 0 : i64, tpu.core_type = #tpu.core_type<tc>, window_params = [{transform_indices = @transform_0, window_bounds = array<i64: 1248, 128>}, {transform_indices = @transform_1, window_bounds = array<i64: 1248, 128>}, {transform_indices = @transform_2, window_bounds = array<i64: 1, 1>}]} {
    %c0 = arith.constant 0 : index
    %c0_0 = arith.constant 0 : index
    %0 = vector.load %arg1[%c0, %c0_0] : memref<1248x128xf32, #tpu.memory_space<vmem>>, vector<1248x128xf32>
    %c0_1 = arith.constant 0 : index
    %c0_2 = arith.constant 0 : index
    %1 = vector.load %arg2[%c0_1, %c0_2] : memref<1248x128xf32, #tpu.memory_space<vmem>>, vector<1248x128xf32>
    %2 = arith.subf %0, %1 : vector<1248x128xf32>
    %3 = arith.mulf %2, %2 : vector<1248x128xf32>
    %4 = vector.shape_cast %3 : vector<1248x128xf32> to vector<1x1248x128xf32>
    %cst = arith.constant dense<0.000000e+00> : vector<1xf32>
    %5 = vector.multi_reduction <add>, %4, %cst [1, 2] : vector<1x1248x128xf32> to vector<1xf32>
    %6 = vector.shape_cast %5 : vector<1xf32> to vector<1x1x1xf32>
    %7 = vector.extract %6[0, 0, 0] : f32 from vector<1x1x1xf32>
    %c0_3 = arith.constant 0 : index
    %c0_4 = arith.constant 0 : index
    %8 = memref.load %arg3[%c0_3, %c0_4] : memref<1x1xf32, #tpu.memory_space<smem>>
    memref.store %7, %arg3[%c0_3, %c0_4] : memref<1x1xf32, #tpu.memory_space<smem>>
    return
  }
  func.func @transform_0(%arg0: i32) -> (i32, i32) {
    %c0_i32 = arith.constant 0 : i32
    %c0_i32_0 = arith.constant 0 : i32
    %c0_i32_1 = arith.constant 0 : i32
    return %c0_i32, %c0_i32_0 : i32, i32
  }
  func.func @transform_1(%arg0: i32) -> (i32, i32) {
    %c0_i32 = arith.constant 0 : i32
    %c0_i32_0 = arith.constant 0 : i32
    %c0_i32_1 = arith.constant 0 : i32
    return %c0_i32, %c0_i32_0 : i32, i32
  }
  func.func @transform_2(%arg0: i32) -> (i32, i32) {
    %c0_i32 = arith.constant 0 : i32
    %c0_i32_0 = arith.constant 0 : i32
    %c0_i32_1 = arith.constant 0 : i32
    return %c0_i32, %c0_i32_0 : i32, i32
  }
}

</mosaic_0001>

<llo_original>
// kernel: tpu_custom_call.1
$region0: #{tpu_custom_call.1}
  #allocation0 [shape = 'u32[]', space=smem, size = 0x4, offset = 0x4, fixed_abs, tag = 'smem constant byte address 0x4 - core index']
  #allocation1 [shape = 'u32[144,128]{1,0:T(1,128)}', space=vmem, size = 0x12000, scoped, tag = 'internal scratch']
  %s0 = inlined_call_operand.hbm [shape: f32[1262,128], index: 0, kind: input, shape index: {}]
  %s1 = inlined_call_operand.hbm [shape: f32[1262,128], index: 1, kind: input, shape index: {}]
  %s2 = inlined_call_operand.hbm [shape: f32[1,1], index: 2, kind: output, shape index: {}]
  %s3 = sld [smem:[#allocation0]]
  $region26: #{tpu_custom_call.1} parent=0
    _
  %s5 = ssub.s32 1, %s3
  %s6 = scalar_select 0, %s5, %s3
  $region1: #{tpu_custom_call.1} parent=0
    #allocation2 [shape = 'u8[638976]{0}', space=vmem, size = 0x9c000, scoped, tag = 'input window, operand 0, single buffered']
    #allocation3 [shape = 's32[1]{0}', space=sflag, size = 0x4, scoped, tag = 'scoped memory for tpu_custom_call.1']
    #allocation4 [shape = 's32[1]{0}', space=sflag, size = 0x4, scoped, tag = 'scoped memory for tpu_custom_call.1']
    #allocation5 [shape = 'u8[638976]{0}', space=vmem, size = 0x9c000, scoped, tag = 'input window, operand 1, single buffered']
    #allocation6 [shape = 's32[1]{0}', space=sflag, size = 0x4, scoped, tag = 'scoped memory for tpu_custom_call.1']
    #allocation7 [shape = 'u8[512]{0}', space=smem, size = 0x200, scoped, tag = 'output window, operand 0, single buffered']
    %7 = vsyncpa [#allocation3], 0
    %8 = vsyncpa [#allocation6], 0
    %9 = vsyncpa [#allocation4], 0
    // Predicated region
    $region2: #{tpu_custom_call.1} parent=1 // pred_check
      _
    $region3: #{tpu_custom_call.1} parent=1 // pred_check_branch
      %11 = sbr.rel (0) target = $region5
    $region4: #{tpu_custom_call.1} parent=1 // pred_region
      %s13 = ssub.s32 19968, 19968
      %14 = vsyncadd [#allocation3], %s13
      %s15 = sshll.u32 [#allocation2], 4
      %s16 = int_to_ptr.vmem [resolvable:$true] %s15
      %21 = dma.hbm_to_vmem [thread:$0]  %s0, 19968, %s16, [#allocation3], 128, 128, 8
    $region5: #{tpu_custom_call.1} parent=1 // pred_fallthru
      _
    // Predicated region
    $region6: #{tpu_custom_call.1} parent=1 // pred_check
      _
    $region7: #{tpu_custom_call.1} parent=1 // pred_check_branch
      %23 = sbr.rel (0) target = $region9
    $region8: #{tpu_custom_call.1} parent=1 // pred_region
      %s25 = ssub.s32 19968, 19968
      %26 = vsyncadd [#allocation6], %s25
      %s27 = sshll.u32 [#allocation5], 4
      %s28 = int_to_ptr.vmem [resolvable:$true] %s27
      %33 = dma.hbm_to_vmem [thread:$0]  %s1, 19968, %s28, [#allocation6], 128, 128, 8
    $region9: #{tpu_custom_call.1} parent=1 // pred_fallthru
      _
    // Predicated region
    $region10: #{tpu_custom_call.1} parent=1 // pred_check
      _
    $region11: #{tpu_custom_call.1} parent=1 // pred_check_branch
      %35 = sbr.rel (0) target = $region13
    $region12: #{tpu_custom_call.1} parent=1 // pred_region
      %36 = dma.done [#allocation3], 19968
    $region13: #{tpu_custom_call.1} parent=1 // pred_fallthru
      _
    // Predicated region
    $region14: #{tpu_custom_call.1} parent=1 // pred_check
      _
    $region15: #{tpu_custom_call.1} parent=1 // pred_check_branch
      %38 = sbr.rel (0) target = $region17
    $region16: #{tpu_custom_call.1} parent=1 // pred_region
      %39 = dma.done [#allocation6], 19968
    $region17: #{tpu_custom_call.1} parent=1 // pred_fallthru
      _
    %v40 = vld [vmem:[#allocation2] sm:$0xff]
    %v41 = vld [vmem:[#allocation2 + $0x8] sm:$0xff]
    %v42 = vld [vmem:[#allocation2 + $0x10] sm:$0xff]
    %v43 = vld [vmem:[#allocation2 + $0x18] sm:$0xff]
    %v44 = vld [vmem:[#allocation2 + $0x20] sm:$0xff]
    %v45 = vld [vmem:[#allocation2 + $0x28] sm:$0xff]
    %v46 = vld [vmem:[#allocation2 + $0x30] sm:$0xff]
    %v47 = vld [vmem:[#allocation2 + $0x38] sm:$0xff]
    %v48 = vld [vmem:[#allocation2 + $0x40] sm:$0xff]
    %v49 = vld [vmem:[#allocation2 + $0x48] sm:$0xff]
    %v50 = vld [vmem:[#allocation2 + $0x50] sm:$0xff]
    %v51 = vld [vmem:[#allocation2 + $0x58] sm:$0xff]
    %v52 = vld [vmem:[#allocation2 + $0x60] sm:$0xff]
    %v53 = vld [vmem:[#allocation2 + $0x68] sm:$0xff]
    %v54 = vld [vmem:[#allocation2 + $0x70] sm:$0xff]
    %v55 = vld [vmem:[#allocation2 + $0x78] sm:$0xff]
    %v56 = vld [vmem:[#allocation2 + $0x80] sm:$0xff]
    %v57 = vld [vmem:[#allocation2 + $0x88] sm:$0xff]
    %v58 = vld [vmem:[#allocation2 + $0x90] sm:$0xff]
    %v59 = vld [vmem:[#allocation2 + $0x98] sm:$0xff]
    %v60 = vld [vmem:[#allocation2 + $0xa0] sm:$0xff]
    %v61 = vld [vmem:[#allocation2 + $0xa8] sm:$0xff]
    %v62 = vld [vmem:[#allocation2 + $0xb0] sm:$0xff]
    %v63 = vld [vmem:[#allocation2 + $0xb8] sm:$0xff]
    %v64 = vld [vmem:[#allocation2 + $0xc0] sm:$0xff]
    %v65 = vld [vmem:[#allocation2 + $0xc8] sm:$0xff]
    %v66 = vld [vmem:[#allocation2 + $0xd0] sm:$0xff]
    %v67 = vld [vmem:[#allocation2 + $0xd8] sm:$0xff]
    %v68 = vld [vmem:[#allocation2 + $0xe0] sm:$0xff]
    %v69 = vld [vmem:[#allocation2 + $0xe8] sm:$0xff]
    %v70 = vld [vmem:[#allocation2 + $0xf0] sm:$0xff]
    %v71 = vld [vmem:[#allocation2 + $0xf8] sm:$0xff]
    %v72 = vld [vmem:[#allocation2 + $0x100] sm:$0xff]
    %v73 = vld [vmem:[#allocation2 + $0x108] sm:$0xff]
    %v74 = vld [vmem:[#allocation2 + $0x110] sm:$0xff]
    %v75 = vld [vmem:[#allocation2 + $0x118] sm:$0xff]
    %v76 = vld [vmem:[#allocation2 + $0x120] sm:$0xff]
    %v77 = vld [vmem:[#allocation2 + $0x128] sm:$0xff]
    %v78 = vld [vmem:[#allocation2 + $0x130] sm:$0xff]
    %v79 = vld [vmem:[#allocation2 + $0x138] sm:$0xff]
    %v80 = vld [vmem:[#allocation2 + $0x140] sm:$0xff]
    %v81 = vld [vmem:[#allocation2 + $0x148] sm:$0xff]
    %v82 = vld [vmem:[#allocation2 + $0x150] sm:$0xff]
    %v83 = vld [vmem:[#allocation2 + $0x158] sm:$0xff]
    %v84 = vld [vmem:[#allocation2 + $0x160] sm:$0xff]
    %v85 = vld [vmem:[#allocation2 + $0x168] sm:$0xff]
    %v86 = vld [vmem:[#allocation2 + $0x170] sm:$0xff]
    %v87 = vld [vmem:[#allocation2 + $0x178] sm:$0xff]
    %v88 = vld [vmem:[#allocation2 + $0x180] sm:$0xff]
    %v89 = vld [vmem:[#allocation2 + $0x188] sm:$0xff]
    %v90 = vld [vmem:[#allocation2 + $0x190] sm:$0xff]
    %v91 = vld [vmem:[#allocation2 + $0x198] sm:$0xff]
    %v92 = vld [vmem:[#allocation2 + $0x1a0] sm:$0xff]
    %v93 = vld [vmem:[#allocation2 + $0x1a8] sm:$0xff]
    %v94 = vld [vmem:[#allocation2 + $0x1b0] sm:$0xff]
    %v95 = vld [vmem:[#allocation2 + $0x1b8] sm:$0xff]
    %v96 = vld [vmem:[#allocation2 + $0x1c0] sm:$0xff]
    %v97 = vld [vmem:[#allocation2 + $0x1c8] sm:$0xff]
    %v98 = vld [vmem:[#allocation2 + $0x1d0] sm:$0xff]
    %v99 = vld [vmem:[#allocation2 + $0x1d8] sm:$0xff]
    %v100 = vld [vmem:[#allocation2 + $0x1e0] sm:$0xff]
    %v101 = vld [vmem:[#allocation2 + $0x1e8] sm:$0xff]
    %v102 = vld [vmem:[#allocation2 + $0x1f0] sm:$0xff]
    %v103 = vld [vmem:[#allocation2 + $0x1f8] sm:$0xff]
    %v104 = vld [vmem:[#allocation2 + $0x200] sm:$0xff]
    %v105 = vld [vmem:[#allocation2 + $0x208] sm:$0xff]
    %v106 = vld [vmem:[#allocation2 + $0x210] sm:$0xff]
    %v107 = vld [vmem:[#allocation2 + $0x218] sm:$0xff]
    %v108 = vld [vmem:[#allocation2 + $0x220] sm:$0xff]
    %v109 = vld [vmem:[#allocation2 + $0x228] sm:$0xff]
    %v110 = vld [vmem:[#allocation2 + $0x230] sm:$0xff]
    %v111 = vld [vmem:[#allocation2 + $0x238] sm:$0xff]
    %v112 = vld [vmem:[#allocation2 + $0x240] sm:$0xff]
    %v113 = vld [vmem:[#allocation2 + $0x248] sm:$0xff]
    %v114 = vld [vmem:[#allocation2 + $0x250] sm:$0xff]
    %v115 = vld [vmem:[#allocation2 + $0x258] sm:$0xff]
    %v116 = vld [vmem:[#allocation2 + $0x260] sm:$0xff]
    %v117 = vld [vmem:[#allocation2 + $0x268] sm:$0xff]
    %v118 = vld [vmem:[#allocation2 + $0x270] sm:$0xff]
    %v119 = vld [vmem:[#allocation2 + $0x278] sm:$0xff]
    %v120 = vld [vmem:[#allocation2 + $0x280] sm:$0xff]
    %v121 = vld [vmem:[#allocation2 + $0x288] sm:$0xff]
    %v122 = vld [vmem:[#allocation2 + $0x290] sm:$0xff]
    %v123 = vld [vmem:[#allocation2 + $0x298] sm:$0xff]
    %v124 = vld [vmem:[#allocation2 + $0x2a0] sm:$0xff]
    %v125 = vld [vmem:[#allocation2 + $0x2a8] sm:$0xff]
    %v126 = vld [vmem:[#allocation2 + $0x2b0] sm:$0xff]
    %v127 = vld [vmem:[#allocation2 + $0x2b8] sm:$0xff]
    %v128 = vld [vmem:[#allocation2 + $0x2c0] sm:$0xff]
    %v129 = vld [vmem:[#allocation2 + $0x2c8] sm:$0xff]
    %v130 = vld [vmem:[#allocation2 + $0x2d0] sm:$0xff]
    %v131 = vld [vmem:[#allocation2 + $0x2d8] sm:$0xff]
    %v132 = vld [vmem:[#allocation2 + $0x2e0] sm:$0xff]
    %v133 = vld [vmem:[#allocation2 + $0x2e8] sm:$0xff]
    %v134 = vld [vmem:[#allocation2 + $0x2f0] sm:$0xff]
    %v135 = vld [vmem:[#allocation2 + $0x2f8] sm:$0xff]
    %v136 = vld [vmem:[#allocation2 + $0x300] sm:$0xff]
    %v137 = vld [vmem:[#allocation2 + $0x308] sm:$0xff]
    %v138 = vld [vmem:[#allocation2 + $0x310] sm:$0xff]
    %v139 = vld [vmem:[#allocation2 + $0x318] sm:$0xff]
    %v140 = vld [vmem:[#allocation2 + $0x320] sm:$0xff]
    %v141 = vld [vmem:[#allocation2 + $0x328] sm:$0xff]
    %v142 = vld [vmem:[#allocation2 + $0x330] sm:$0xff]
    %v143 = vld [vmem:[#allocation2 + $0x338] sm:$0xff]
    %v144 = vld [vmem:[#allocation2 + $0x340] sm:$0xff]
    %v145 = vld [vmem:[#allocation2 + $0x348] sm:$0xff]
    %v146 = vld [vmem:[#allocation2 + $0x350] sm:$0xff]
    %v147 = vld [vmem:[#allocation2 + $0x358] sm:$0xff]
    %v148 = vld [vmem:[#allocation2 + $0x360] sm:$0xff]
    %v149 = vld [vmem:[#allocation2 + $0x368] sm:$0xff]
    %v150 = vld [vmem:[#allocation2 + $0x370] sm:$0xff]
    %v151 = vld [vmem:[#allocation2 + $0x378] sm:$0xff]
    %v152 = vld [vmem:[#allocation2 + $0x380] sm:$0xff]
    %v153 = vld [vmem:[#allocation2 + $0x388] sm:$0xff]
    %v154 = vld [vmem:[#allocation2 + $0x390] sm:$0xff]
    %v155 = vld [vmem:[#allocation2 + $0x398] sm:$0xff]
    %v156 = vld [vmem:[#allocation2 + $0x3a0] sm:$0xff]
    %v157 = vld [vmem:[#allocation2 + $0x3a8] sm:$0xff]
    %v158 = vld [vmem:[#allocation2 + $0x3b0] sm:$0xff]
    %v159 = vld [vmem:[#allocation2 + $0x3b8] sm:$0xff]
    %v160 = vld [vmem:[#allocation2 + $0x3c0] sm:$0xff]
    %v161 = vld [vmem:[#allocation2 + $0x3c8] sm:$0xff]
    %v162 = vld [vmem:[#allocation2 + $0x3d0] sm:$0xff]
    %v163 = vld [vmem:[#allocation2 + $0x3d8] sm:$0xff]
    %v164 = vld [vmem:[#allocation2 + $0x3e0] sm:$0xff]
    %v165 = vld [vmem:[#allocation2 + $0x3e8] sm:$0xff]
    %v166 = vld [vmem:[#allocation2 + $0x3f0] sm:$0xff]
    %v167 = vld [vmem:[#allocation2 + $0x3f8] sm:$0xff]
    %v168 = vld [vmem:[#allocation2 + $0x400] sm:$0xff]
    %v169 = vld [vmem:[#allocation2 + $0x408] sm:$0xff]
    %v170 = vld [vmem:[#allocation2 + $0x410] sm:$0xff]
    %v171 = vld [vmem:[#allocation2 + $0x418] sm:$0xff]
    %v172 = vld [vmem:[#allocation2 + $0x420] sm:$0xff]
    %v173 = vld [vmem:[#allocation2 + $0x428] sm:$0xff]
    %v174 = vld [vmem:[#allocation2 + $0x430] sm:$0xff]
    %v175 = vld [vmem:[#allocation2 + $0x438] sm:$0xff]
    %v176 = vld [vmem:[#allocation2 + $0x440] sm:$0xff]
    %v177 = vld [vmem:[#allocation2 + $0x448] sm:$0xff]
    %v178 = vld [vmem:[#allocation2 + $0x450] sm:$0xff]
    %v179 = vld [vmem:[#allocation2 + $0x458] sm:$0xff]
    %v180 = vld [vmem:[#allocation2 + $0x460] sm:$0xff]
    %v181 = vld [vmem:[#allocation2 + $0x468] sm:$0xff]
    %v182 = vld [vmem:[#allocation2 + $0x470] sm:$0xff]
    %v183 = vld [vmem:[#allocation2 + $0x478] sm:$0xff]
    %v184 = vld [vmem:[#allocation2 + $0x480] sm:$0xff]
    %v185 = vld [vmem:[#allocation2 + $0x488] sm:$0xff]
    %v186 = vld [vmem:[#allocation2 + $0x490] sm:$0xff]
    %v187 = vld [vmem:[#allocation2 + $0x498] sm:$0xff]
    %v188 = vld [vmem:[#allocation2 + $0x4a0] sm:$0xff]
    %v189 = vld [vmem:[#allocation2 + $0x4a8] sm:$0xff]
    %v190 = vld [vmem:[#allocation2 + $0x4b0] sm:$0xff]
    %v191 = vld [vmem:[#allocation2 + $0x4b8] sm:$0xff]
    %v192 = vld [vmem:[#allocation2 + $0x4c0] sm:$0xff]
    %v193 = vld [vmem:[#allocation2 + $0x4c8] sm:$0xff]
    %v194 = vld [vmem:[#allocation2 + $0x4d0] sm:$0xff]
    %v195 = vld [vmem:[#allocation2 + $0x4d8] sm:$0xff]
    %v196 = vld [vmem:[#allocation5] sm:$0xff]
    %v197 = vld [vmem:[#allocation5 + $0x8] sm:$0xff]
    %v198 = vld [vmem:[#allocation5 + $0x10] sm:$0xff]
    %v199 = vld [vmem:[#allocation5 + $0x18] sm:$0xff]
    %v200 = vld [vmem:[#allocation5 + $0x20] sm:$0xff]
    %v201 = vld [vmem:[#allocation5 + $0x28] sm:$0xff]
    %v202 = vld [vmem:[#allocation5 + $0x30] sm:$0xff]
    %v203 = vld [vmem:[#allocation5 + $0x38] sm:$0xff]
    %v204 = vld [vmem:[#allocation5 + $0x40] sm:$0xff]
    %v205 = vld [vmem:[#allocation5 + $0x48] sm:$0xff]
    %v206 = vld [vmem:[#allocation5 + $0x50] sm:$0xff]
    %v207 = vld [vmem:[#allocation5 + $0x58] sm:$0xff]
    %v208 = vld [vmem:[#allocation5 + $0x60] sm:$0xff]
    %v209 = vld [vmem:[#allocation5 + $0x68] sm:$0xff]
    %v210 = vld [vmem:[#allocation5 + $0x70] sm:$0xff]
    %v211 = vld [vmem:[#allocation5 + $0x78] sm:$0xff]
    %v212 = vld [vmem:[#allocation5 + $0x80] sm:$0xff]
    %v213 = vld [vmem:[#allocation5 + $0x88] sm:$0xff]
    %v214 = vld [vmem:[#allocation5 + $0x90] sm:$0xff]
    %v215 = vld [vmem:[#allocation5 + $0x98] sm:$0xff]
    %v216 = vld [vmem:[#allocation5 + $0xa0] sm:$0xff]
    %v217 = vld [vmem:[#allocation5 + $0xa8] sm:$0xff]
    %v218 = vld [vmem:[#allocation5 + $0xb0] sm:$0xff]
    %v219 = vld [vmem:[#allocation5 + $0xb8] sm:$0xff]
    %v220 = vld [vmem:[#allocation5 + $0xc0] sm:$0xff]
    %v221 = vld [vmem:[#allocation5 + $0xc8] sm:$0xff]
    %v222 = vld [vmem:[#allocation5 + $0xd0] sm:$0xff]
    %v223 = vld [vmem:[#allocation5 + $0xd8] sm:$0xff]
    %v224 = vld [vmem:[#allocation5 + $0xe0] sm:$0xff]
    %v225 = vld [vmem:[#allocation5 + $0xe8] sm:$0xff]
    %v226 = vld [vmem:[#allocation5 + $0xf0] sm:$0xff]
    %v227 = vld [vmem:[#allocation5 + $0xf8] sm:$0xff]
    %v228 = vld [vmem:[#allocation5 + $0x100] sm:$0xff]
    %v229 = vld [vmem:[#allocation5 + $0x108] sm:$0xff]
    %v230 = vld [vmem:[#allocation5 + $0x110] sm:$0xff]
    %v231 = vld [vmem:[#allocation5 + $0x118] sm:$0xff]
    %v232 = vld [vmem:[#allocation5 + $0x120] sm:$0xff]
    %v233 = vld [vmem:[#allocation5 + $0x128] sm:$0xff]
    %v234 = vld [vmem:[#allocation5 + $0x130] sm:$0xff]
    %v235 = vld [vmem:[#allocation5 + $0x138] sm:$0xff]
    %v236 = vld [vmem:[#allocation5 + $0x140] sm:$0xff]
    %v237 = vld [vmem:[#allocation5 + $0x148] sm:$0xff]
    %v238 = vld [vmem:[#allocation5 + $0x150] sm:$0xff]
    %v239 = vld [vmem:[#allocation5 + $0x158] sm:$0xff]
    %v240 = vld [vmem:[#allocation5 + $0x160] sm:$0xff]
    %v241 = vld [vmem:[#allocation5 + $0x168] sm:$0xff]
    %v242 = vld [vmem:[#allocation5 + $0x170] sm:$0xff]
    %v243 = vld [vmem:[#allocation5 + $0x178] sm:$0xff]
    %v244 = vld [vmem:[#allocation5 + $0x180] sm:$0xff]
    %v245 = vld [vmem:[#allocation5 + $0x188] sm:$0xff]
    %v246 = vld [vmem:[#allocation5 + $0x190] sm:$0xff]
    %v247 = vld [vmem:[#allocation5 + $0x198] sm:$0xff]
    %v248 = vld [vmem:[#allocation5 + $0x1a0] sm:$0xff]
    %v249 = vld [vmem:[#allocation5 + $0x1a8] sm:$0xff]
    %v250 = vld [vmem:[#allocation5 + $0x1b0] sm:$0xff]
    %v251 = vld [vmem:[#allocation5 + $0x1b8] sm:$0xff]
    %v252 = vld [vmem:[#allocation5 + $0x1c0] sm:$0xff]
    %v253 = vld [vmem:[#allocation5 + $0x1c8] sm:$0xff]
    %v254 = vld [vmem:[#allocation5 + $0x1d0] sm:$0xff]
    %v255 = vld [vmem:[#allocation5 + $0x1d8] sm:$0xff]
    %v256 = vld [vmem:[#allocation5 + $0x1e0] sm:$0xff]
    %v257 = vld [vmem:[#allocation5 + $0x1e8] sm:$0xff]
    %v258 = vld [vmem:[#allocation5 + $0x1f0] sm:$0xff]
    %v259 = vld [vmem:[#allocation5 + $0x1f8] sm:$0xff]
    %v260 = vld [vmem:[#allocation5 + $0x200] sm:$0xff]
    %v261 = vld [vmem:[#allocation5 + $0x208] sm:$0xff]
    %v262 = vld [vmem:[#allocation5 + $0x210] sm:$0xff]
    %v263 = vld [vmem:[#allocation5 + $0x218] sm:$0xff]
    %v264 = vld [vmem:[#allocation5 + $0x220] sm:$0xff]
    %v265 = vld [vmem:[#allocation5 + $0x228] sm:$0xff]
    %v266 = vld [vmem:[#allocation5 + $0x230] sm:$0xff]
    %v267 = vld [vmem:[#allocation5 + $0x238] sm:$0xff]
    %v268 = vld [vmem:[#allocation5 + $0x240] sm:$0xff]
    %v269 = vld [vmem:[#allocation5 + $0x248] sm:$0xff]
    %v270 = vld [vmem:[#allocation5 + $0x250] sm:$0xff]
    %v271 = vld [vmem:[#allocation5 + $0x258] sm:$0xff]
    %v272 = vld [vmem:[#allocation5 + $0x260] sm:$0xff]
    %v273 = vld [vmem:[#allocation5 + $0x268] sm:$0xff]
    %v274 = vld [vmem:[#allocation5 + $0x270] sm:$0xff]
    %v275 = vld [vmem:[#allocation5 + $0x278] sm:$0xff]
    %v276 = vld [vmem:[#allocation5 + $0x280] sm:$0xff]
    %v277 = vld [vmem:[#allocation5 + $0x288] sm:$0xff]
    %v278 = vld [vmem:[#allocation5 + $0x290] sm:$0xff]
    %v279 = vld [vmem:[#allocation5 + $0x298] sm:$0xff]
    %v280 = vld [vmem:[#allocation5 + $0x2a0] sm:$0xff]
    %v281 = vld [vmem:[#allocation5 + $0x2a8] sm:$0xff]
    %v282 = vld [vmem:[#allocation5 + $0x2b0] sm:$0xff]
    %v283 = vld [vmem:[#allocation5 + $0x2b8] sm:$0xff]
    %v284 = vld [vmem:[#allocation5 + $0x2c0] sm:$0xff]
    %v285 = vld [vmem:[#allocation5 + $0x2c8] sm:$0xff]
    %v286 = vld [vmem:[#allocation5 + $0x2d0] sm:$0xff]
    %v287 = vld [vmem:[#allocation5 + $0x2d8] sm:$0xff]
    %v288 = vld [vmem:[#allocation5 + $0x2e0] sm:$0xff]
    %v289 = vld [vmem:[#allocation5 + $0x2e8] sm:$0xff]
    %v290 = vld [vmem:[#allocation5 + $0x2f0] sm:$0xff]
    %v291 = vld [vmem:[#allocation5 + $0x2f8] sm:$0xff]
    %v292 = vld [vmem:[#allocation5 + $0x300] sm:$0xff]
    %v293 = vld [vmem:[#allocation5 + $0x308] sm:$0xff]
    %v294 = vld [vmem:[#allocation5 + $0x310] sm:$0xff]
    %v295 = vld [vmem:[#allocation5 + $0x318] sm:$0xff]
    %v296 = vld [vmem:[#allocation5 + $0x320] sm:$0xff]
    %v297 = vld [vmem:[#allocation5 + $0x328] sm:$0xff]
    %v298 = vld [vmem:[#allocation5 + $0x330] sm:$0xff]
    %v299 = vld [vmem:[#allocation5 + $0x338] sm:$0xff]
    %v300 = vld [vmem:[#allocation5 + $0x340] sm:$0xff]
    %v301 = vld [vmem:[#allocation5 + $0x348] sm:$0xff]
    %v302 = vld [vmem:[#allocation5 + $0x350] sm:$0xff]
    %v303 = vld [vmem:[#allocation5 + $0x358] sm:$0xff]
    %v304 = vld [vmem:[#allocation5 + $0x360] sm:$0xff]
    %v305 = vld [vmem:[#allocation5 + $0x368] sm:$0xff]
    %v306 = vld [vmem:[#allocation5 + $0x370] sm:$0xff]
    %v307 = vld [vmem:[#allocation5 + $0x378] sm:$0xff]
    %v308 = vld [vmem:[#allocation5 + $0x380] sm:$0xff]
    %v309 = vld [vmem:[#allocation5 + $0x388] sm:$0xff]
    %v310 = vld [vmem:[#allocation5 + $0x390] sm:$0xff]
    %v311 = vld [vmem:[#allocation5 + $0x398] sm:$0xff]
    %v312 = vld [vmem:[#allocation5 + $0x3a0] sm:$0xff]
    %v313 = vld [vmem:[#allocation5 + $0x3a8] sm:$0xff]
    %v314 = vld [vmem:[#allocation5 + $0x3b0] sm:$0xff]
    %v315 = vld [vmem:[#allocation5 + $0x3b8] sm:$0xff]
    %v316 = vld [vmem:[#allocation5 + $0x3c0] sm:$0xff]
    %v317 = vld [vmem:[#allocation5 + $0x3c8] sm:$0xff]
    %v318 = vld [vmem:[#allocation5 + $0x3d0] sm:$0xff]
    %v319 = vld [vmem:[#allocation5 + $0x3d8] sm:$0xff]
    %v320 = vld [vmem:[#allocation5 + $0x3e0] sm:$0xff]
    %v321 = vld [vmem:[#allocation5 + $0x3e8] sm:$0xff]
    %v322 = vld [vmem:[#allocation5 + $0x3f0] sm:$0xff]
    %v323 = vld [vmem:[#allocation5 + $0x3f8] sm:$0xff]
    %v324 = vld [vmem:[#allocation5 + $0x400] sm:$0xff]
    %v325 = vld [vmem:[#allocation5 + $0x408] sm:$0xff]
    %v326 = vld [vmem:[#allocation5 + $0x410] sm:$0xff]
    %v327 = vld [vmem:[#allocation5 + $0x418] sm:$0xff]
    %v328 = vld [vmem:[#allocation5 + $0x420] sm:$0xff]
    %v329 = vld [vmem:[#allocation5 + $0x428] sm:$0xff]
    %v330 = vld [vmem:[#allocation5 + $0x430] sm:$0xff]
    %v331 = vld [vmem:[#allocation5 + $0x438] sm:$0xff]
    %v332 = vld [vmem:[#allocation5 + $0x440] sm:$0xff]
    %v333 = vld [vmem:[#allocation5 + $0x448] sm:$0xff]
    %v334 = vld [vmem:[#allocation5 + $0x450] sm:$0xff]
    %v335 = vld [vmem:[#allocation5 + $0x458] sm:$0xff]
    %v336 = vld [vmem:[#allocation5 + $0x460] sm:$0xff]
    %v337 = vld [vmem:[#allocation5 + $0x468] sm:$0xff]
    %v338 = vld [vmem:[#allocation5 + $0x470] sm:$0xff]
    %v339 = vld [vmem:[#allocation5 + $0x478] sm:$0xff]
    %v340 = vld [vmem:[#allocation5 + $0x480] sm:$0xff]
    %v341 = vld [vmem:[#allocation5 + $0x488] sm:$0xff]
    %v342 = vld [vmem:[#allocation5 + $0x490] sm:$0xff]
    %v343 = vld [vmem:[#allocation5 + $0x498] sm:$0xff]
    %v344 = vld [vmem:[#allocation5 + $0x4a0] sm:$0xff]
    %v345 = vld [vmem:[#allocation5 + $0x4a8] sm:$0xff]
    %v346 = vld [vmem:[#allocation5 + $0x4b0] sm:$0xff]
    %v347 = vld [vmem:[#allocation5 + $0x4b8] sm:$0xff]
    %v348 = vld [vmem:[#allocation5 + $0x4c0] sm:$0xff]
    %v349 = vld [vmem:[#allocation5 + $0x4c8] sm:$0xff]
    %v350 = vld [vmem:[#allocation5 + $0x4d0] sm:$0xff]
    %v351 = vld [vmem:[#allocation5 + $0x4d8] sm:$0xff]
    %v352 = vsub.f32 %v40, %v196
    %v353 = vsub.f32 %v41, %v197
    %v354 = vsub.f32 %v42, %v198
    %v355 = vsub.f32 %v43, %v199
    %v356 = vsub.f32 %v44, %v200
    %v357 = vsub.f32 %v45, %v201
    %v358 = vsub.f32 %v46, %v202
    %v359 = vsub.f32 %v47, %v203
    %v360 = vsub.f32 %v48, %v204
    %v361 = vsub.f32 %v49, %v205
    %v362 = vsub.f32 %v50, %v206
    %v363 = vsub.f32 %v51, %v207
    %v364 = vsub.f32 %v52, %v208
    %v365 = vsub.f32 %v53, %v209
    %v366 = vsub.f32 %v54, %v210
    %v367 = vsub.f32 %v55, %v211
    %v368 = vsub.f32 %v56, %v212
    %v369 = vsub.f32 %v57, %v213
    %v370 = vsub.f32 %v58, %v214
    %v371 = vsub.f32 %v59, %v215
    %v372 = vsub.f32 %v60, %v216
    %v373 = vsub.f32 %v61, %v217
    %v374 = vsub.f32 %v62, %v218
    %v375 = vsub.f32 %v63, %v219
    %v376 = vsub.f32 %v64, %v220
    %v377 = vsub.f32 %v65, %v221
    %v378 = vsub.f32 %v66, %v222
    %v379 = vsub.f32 %v67, %v223
    %v380 = vsub.f32 %v68, %v224
    %v381 = vsub.f32 %v69, %v225
    %v382 = vsub.f32 %v70, %v226
    %v383 = vsub.f32 %v71, %v227
    %v384 = vsub.f32 %v72, %v228
    %v385 = vsub.f32 %v73, %v229
    %v386 = vsub.f32 %v74, %v230
    %v387 = vsub.f32 %v75, %v231
    %v388 = vsub.f32 %v76, %v232
    %v389 = vsub.f32 %v77, %v233
    %v390 = vsub.f32 %v78, %v234
    %v391 = vsub.f32 %v79, %v235
    %v392 = vsub.f32 %v80, %v236
    %v393 = vsub.f32 %v81, %v237
    %v394 = vsub.f32 %v82, %v238
    %v395 = vsub.f32 %v83, %v239
    %v396 = vsub.f32 %v84, %v240
    %v397 = vsub.f32 %v85, %v241
    %v398 = vsub.f32 %v86, %v242
    %v399 = vsub.f32 %v87, %v243
    %v400 = vsub.f32 %v88, %v244
    %v401 = vsub.f32 %v89, %v245
    %v402 = vsub.f32 %v90, %v246
    %v403 = vsub.f32 %v91, %v247
    %v404 = vsub.f32 %v92, %v248
    %v405 = vsub.f32 %v93, %v249
    %v406 = vsub.f32 %v94, %v250
    %v407 = vsub.f32 %v95, %v251
    %v408 = vsub.f32 %v96, %v252
    %v409 = vsub.f32 %v97, %v253
    %v410 = vsub.f32 %v98, %v254
    %v411 = vsub.f32 %v99, %v255
    %v412 = vsub.f32 %v100, %v256
    %v413 = vsub.f32 %v101, %v257
    %v414 = vsub.f32 %v102, %v258
    %v415 = vsub.f32 %v103, %v259
    %v416 = vsub.f32 %v104, %v260
    %v417 = vsub.f32 %v105, %v261
    %v418 = vsub.f32 %v106, %v262
    %v419 = vsub.f32 %v107, %v263
    %v420 = vsub.f32 %v108, %v264
    %v421 = vsub.f32 %v109, %v265
    %v422 = vsub.f32 %v110, %v266
    %v423 = vsub.f32 %v111, %v267
    %v424 = vsub.f32 %v112, %v268
    %v425 = vsub.f32 %v113, %v269
    %v426 = vsub.f32 %v114, %v270
    %v427 = vsub.f32 %v115, %v271
    %v428 = vsub.f32 %v116, %v272
    %v429 = vsub.f32 %v117, %v273
    %v430 = vsub.f32 %v118, %v274
    %v431 = vsub.f32 %v119, %v275
    %v432 = vsub.f32 %v120, %v276
    %v433 = vsub.f32 %v121, %v277
    %v434 = vsub.f32 %v122, %v278
    %v435 = vsub.f32 %v123, %v279
    %v436 = vsub.f32 %v124, %v280
    %v437 = vsub.f32 %v125, %v281
    %v438 = vsub.f32 %v126, %v282
    %v439 = vsub.f32 %v127, %v283
    %v440 = vsub.f32 %v128, %v284
    %v441 = vsub.f32 %v129, %v285
    %v442 = vsub.f32 %v130, %v286
    %v443 = vsub.f32 %v131, %v287
    %v444 = vsub.f32 %v132, %v288
    %v445 = vsub.f32 %v133, %v289
    %v446 = vsub.f32 %v134, %v290
    %v447 = vsub.f32 %v135, %v291
    %v448 = vsub.f32 %v136, %v292
    %v449 = vsub.f32 %v137, %v293
    %v450 = vsub.f32 %v138, %v294
    %v451 = vsub.f32 %v139, %v295
    %v452 = vsub.f32 %v140, %v296
    %v453 = vsub.f32 %v141, %v297
    %v454 = vsub.f32 %v142, %v298
    %v455 = vsub.f32 %v143, %v299
    %v456 = vsub.f32 %v144, %v300
    %v457 = vsub.f32 %v145, %v301
    %v458 = vsub.f32 %v146, %v302
    %v459 = vsub.f32 %v147, %v303
    %v460 = vsub.f32 %v148, %v304
    %v461 = vsub.f32 %v149, %v305
    %v462 = vsub.f32 %v150, %v306
    %v463 = vsub.f32 %v151, %v307
    %v464 = vsub.f32 %v152, %v308
    %v465 = vsub.f32 %v153, %v309
    %v466 = vsub.f32 %v154, %v310
    %v467 = vsub.f32 %v155, %v311
    %v468 = vsub.f32 %v156, %v312
    %v469 = vsub.f32 %v157, %v313
    %v470 = vsub.f32 %v158, %v314
    %v471 = vsub.f32 %v159, %v315
    %v472 = vsub.f32 %v160, %v316
    %v473 = vsub.f32 %v161, %v317
    %v474 = vsub.f32 %v162, %v318
    %v475 = vsub.f32 %v163, %v319
    %v476 = vsub.f32 %v164, %v320
    %v477 = vsub.f32 %v165, %v321
    %v478 = vsub.f32 %v166, %v322
    %v479 = vsub.f32 %v167, %v323
    %v480 = vsub.f32 %v168, %v324
    %v481 = vsub.f32 %v169, %v325
    %v482 = vsub.f32 %v170, %v326
    %v483 = vsub.f32 %v171, %v327
    %v484 = vsub.f32 %v172, %v328
    %v485 = vsub.f32 %v173, %v329
    %v486 = vsub.f32 %v174, %v330
    %v487 = vsub.f32 %v175, %v331
    %v488 = vsub.f32 %v176, %v332
    %v489 = vsub.f32 %v177, %v333
    %v490 = vsub.f32 %v178, %v334
    %v491 = vsub.f32 %v179, %v335
    %v492 = vsub.f32 %v180, %v336
    %v493 = vsub.f32 %v181, %v337
    %v494 = vsub.f32 %v182, %v338
    %v495 = vsub.f32 %v183, %v339
    %v496 = vsub.f32 %v184, %v340
    %v497 = vsub.f32 %v185, %v341
    %v498 = vsub.f32 %v186, %v342
    %v499 = vsub.f32 %v187, %v343
    %v500 = vsub.f32 %v188, %v344
    %v501 = vsub.f32 %v189, %v345
    %v502 = vsub.f32 %v190, %v346
    %v503 = vsub.f32 %v191, %v347
    %v504 = vsub.f32 %v192, %v348
    %v505 = vsub.f32 %v193, %v349
    %v506 = vsub.f32 %v194, %v350
    %v507 = vsub.f32 %v195, %v351
    %v508 = vmul.f32 %v352, %v352
    %v509 = vmul.f32 %v353, %v353
    %v510 = vmul.f32 %v354, %v354
    %v511 = vmul.f32 %v355, %v355
    %v512 = vmul.f32 %v356, %v356
    %v513 = vmul.f32 %v357, %v357
    %v514 = vmul.f32 %v358, %v358
    %v515 = vmul.f32 %v359, %v359
    %v516 = vmul.f32 %v360, %v360
    %v517 = vmul.f32 %v361, %v361
    %v518 = vmul.f32 %v362, %v362
    %v519 = vmul.f32 %v363, %v363
    %v520 = vmul.f32 %v364, %v364
    %v521 = vmul.f32 %v365, %v365
    %v522 = vmul.f32 %v366, %v366
    %v523 = vmul.f32 %v367, %v367
    %v524 = vmul.f32 %v368, %v368
    %v525 = vmul.f32 %v369, %v369
    %v526 = vmul.f32 %v370, %v370
    %v527 = vmul.f32 %v371, %v371
    %v528 = vmul.f32 %v372, %v372
    %v529 = vmul.f32 %v373, %v373
    %v530 = vmul.f32 %v374, %v374
    %v531 = vmul.f32 %v375, %v375
    %v532 = vmul.f32 %v376, %v376
    %v533 = vmul.f32 %v377, %v377
    %v534 = vmul.f32 %v378, %v378
    %v535 = vmul.f32 %v379, %v379
    %v536 = vmul.f32 %v380, %v380
    %v537 = vmul.f32 %v381, %v381
    %v538 = vmul.f32 %v382, %v382
    %v539 = vmul.f32 %v383, %v383
    %v540 = vmul.f32 %v384, %v384
    %v541 = vmul.f32 %v385, %v385
    %v542 = vmul.f32 %v386, %v386
    %v543 = vmul.f32 %v387, %v387
    %v544 = vmul.f32 %v388, %v388
    %v545 = vmul.f32 %v389, %v389
    %v546 = vmul.f32 %v390, %v390
    %v547 = vmul.f32 %v391, %v391
    %v548 = vmul.f32 %v392, %v392
    %v549 = vmul.f32 %v393, %v393
    %v550 = vmul.f32 %v394, %v394
    %v551 = vmul.f32 %v395, %v395
    %v552 = vmul.f32 %v396, %v396
    %v553 = vmul.f32 %v397, %v397
    %v554 = vmul.f32 %v398, %v398
    %v555 = vmul.f32 %v399, %v399
    %v556 = vmul.f32 %v400, %v400
    %v557 = vmul.f32 %v401, %v401
    %v558 = vmul.f32 %v402, %v402
    %v559 = vmul.f32 %v403, %v403
    %v560 = vmul.f32 %v404, %v404
    %v561 = vmul.f32 %v405, %v405
    %v562 = vmul.f32 %v406, %v406
    %v563 = vmul.f32 %v407, %v407
    %v564 = vmul.f32 %v408, %v408
    %v565 = vmul.f32 %v409, %v409
    %v566 = vmul.f32 %v410, %v410
    %v567 = vmul.f32 %v411, %v411
    %v568 = vmul.f32 %v412, %v412
    %v569 = vmul.f32 %v413, %v413
    %v570 = vmul.f32 %v414, %v414
    %v571 = vmul.f32 %v415, %v415
    %v572 = vmul.f32 %v416, %v416
    %v573 = vmul.f32 %v417, %v417
    %v574 = vmul.f32 %v418, %v418
    %v575 = vmul.f32 %v419, %v419
    %v576 = vmul.f32 %v420, %v420
    %v577 = vmul.f32 %v421, %v421
    %v578 = vmul.f32 %v422, %v422
    %v579 = vmul.f32 %v423, %v423
    %v580 = vmul.f32 %v424, %v424
    %v581 = vmul.f32 %v425, %v425
    %v582 = vmul.f32 %v426, %v426
    %v583 = vmul.f32 %v427, %v427
    %v584 = vmul.f32 %v428, %v428
    %v585 = vmul.f32 %v429, %v429
    %v586 = vmul.f32 %v430, %v430
    %v587 = vmul.f32 %v431, %v431
    %v588 = vmul.f32 %v432, %v432
    %v589 = vmul.f32 %v433, %v433
    %v590 = vmul.f32 %v434, %v434
    %v591 = vmul.f32 %v435, %v435
    %v592 = vmul.f32 %v436, %v436
    %v593 = vmul.f32 %v437, %v437
    %v594 = vmul.f32 %v438, %v438
    %v595 = vmul.f32 %v439, %v439
    %v596 = vmul.f32 %v440, %v440
    %v597 = vmul.f32 %v441, %v441
    %v598 = vmul.f32 %v442, %v442
    %v599 = vmul.f32 %v443, %v443
    %v600 = vmul.f32 %v444, %v444
    %v601 = vmul.f32 %v445, %v445
    %v602 = vmul.f32 %v446, %v446
    %v603 = vmul.f32 %v447, %v447
    %v604 = vmul.f32 %v448, %v448
    %v605 = vmul.f32 %v449, %v449
    %v606 = vmul.f32 %v450, %v450
    %v607 = vmul.f32 %v451, %v451
    %v608 = vmul.f32 %v452, %v452
    %v609 = vmul.f32 %v453, %v453
    %v610 = vmul.f32 %v454, %v454
    %v611 = vmul.f32 %v455, %v455
    %v612 = vmul.f32 %v456, %v456
    %v613 = vmul.f32 %v457, %v457
    %v614 = vmul.f32 %v458, %v458
    %v615 = vmul.f32 %v459, %v459
    %v616 = vmul.f32 %v460, %v460
    %v617 = vmul.f32 %v461, %v461
    %v618 = vmul.f32 %v462, %v462
    %v619 = vmul.f32 %v463, %v463
    %v620 = vmul.f32 %v464, %v464
    %v621 = vmul.f32 %v465, %v465
    %v622 = vmul.f32 %v466, %v466
    %v623 = vmul.f32 %v467, %v467
    %v624 = vmul.f32 %v468, %v468
    %v625 = vmul.f32 %v469, %v469
    %v626 = vmul.f32 %v470, %v470
    %v627 = vmul.f32 %v471, %v471
    %v628 = vmul.f32 %v472, %v472
    %v629 = vmul.f32 %v473, %v473
    %v630 = vmul.f32 %v474, %v474
    %v631 = vmul.f32 %v475, %v475
    %v632 = vmul.f32 %v476, %v476
    %v633 = vmul.f32 %v477, %v477
    %v634 = vmul.f32 %v478, %v478
    %v635 = vmul.f32 %v479, %v479
    %v636 = vmul.f32 %v480, %v480
    %v637 = vmul.f32 %v481, %v481
    %v638 = vmul.f32 %v482, %v482
    %v639 = vmul.f32 %v483, %v483
    %v640 = vmul.f32 %v484, %v484
    %v641 = vmul.f32 %v485, %v485
    %v642 = vmul.f32 %v486, %v486
    %v643 = vmul.f32 %v487, %v487
    %v644 = vmul.f32 %v488, %v488
    %v645 = vmul.f32 %v489, %v489
    %v646 = vmul.f32 %v490, %v490
    %v647 = vmul.f32 %v491, %v491
    %v648 = vmul.f32 %v492, %v492
    %v649 = vmul.f32 %v493, %v493
    %v650 = vmul.f32 %v494, %v494
    %v651 = vmul.f32 %v495, %v495
    %v652 = vmul.f32 %v496, %v496
    %v653 = vmul.f32 %v497, %v497
    %v654 = vmul.f32 %v498, %v498
    %v655 = vmul.f32 %v499, %v499
    %v656 = vmul.f32 %v500, %v500
    %v657 = vmul.f32 %v501, %v501
    %v658 = vmul.f32 %v502, %v502
    %v659 = vmul.f32 %v503, %v503
    %v660 = vmul.f32 %v504, %v504
    %v661 = vmul.f32 %v505, %v505
    %v662 = vmul.f32 %v506, %v506
    %v663 = vmul.f32 %v507, %v507
    %v664 = vadd.f32 %v508, %v509
    %v665 = vadd.f32 %v664, %v510
    %v666 = vadd.f32 %v665, %v511
    %v667 = vadd.f32 %v666, %v512
    %v668 = vadd.f32 %v667, %v513
    %v669 = vadd.f32 %v668, %v514
    %v670 = vadd.f32 %v669, %v515
    %v671 = vadd.f32 %v670, %v516
    %v672 = vadd.f32 %v671, %v517
    %v673 = vadd.f32 %v672, %v518
    %v674 = vadd.f32 %v673, %v519
    %v675 = vadd.f32 %v674, %v520
    %v676 = vadd.f32 %v675, %v521
    %v677 = vadd.f32 %v676, %v522
    %v678 = vadd.f32 %v677, %v523
    %v679 = vadd.f32 %v678, %v524
    %v680 = vadd.f32 %v679, %v525
    %v681 = vadd.f32 %v680, %v526
    %v682 = vadd.f32 %v681, %v527
    %v683 = vadd.f32 %v682, %v528
    %v684 = vadd.f32 %v683, %v529
    %v685 = vadd.f32 %v684, %v530
    %v686 = vadd.f32 %v685, %v531
    %v687 = vadd.f32 %v686, %v532
    %v688 = vadd.f32 %v687, %v533
    %v689 = vadd.f32 %v688, %v534
    %v690 = vadd.f32 %v689, %v535
    %v691 = vadd.f32 %v690, %v536
    %v692 = vadd.f32 %v691, %v537
    %v693 = vadd.f32 %v692, %v538
    %v694 = vadd.f32 %v693, %v539
    %v695 = vadd.f32 %v694, %v540
    %v696 = vadd.f32 %v695, %v541
    %v697 = vadd.f32 %v696, %v542
    %v698 = vadd.f32 %v697, %v543
    %v699 = vadd.f32 %v698, %v544
    %v700 = vadd.f32 %v699, %v545
    %v701 = vadd.f32 %v700, %v546
    %v702 = vadd.f32 %v701, %v547
    %v703 = vadd.f32 %v702, %v548
    %v704 = vadd.f32 %v703, %v549
    %v705 = vadd.f32 %v704, %v550
    %v706 = vadd.f32 %v705, %v551
    %v707 = vadd.f32 %v706, %v552
    %v708 = vadd.f32 %v707, %v553
    %v709 = vadd.f32 %v708, %v554
    %v710 = vadd.f32 %v709, %v555
    %v711 = vadd.f32 %v710, %v556
    %v712 = vadd.f32 %v711, %v557
    %v713 = vadd.f32 %v712, %v558
    %v714 = vadd.f32 %v713, %v559
    %v715 = vadd.f32 %v714, %v560
    %v716 = vadd.f32 %v715, %v561
    %v717 = vadd.f32 %v716, %v562
    %v718 = vadd.f32 %v717, %v563
    %v719 = vadd.f32 %v718, %v564
    %v720 = vadd.f32 %v719, %v565
    %v721 = vadd.f32 %v720, %v566
    %v722 = vadd.f32 %v721, %v567
    %v723 = vadd.f32 %v722, %v568
    %v724 = vadd.f32 %v723, %v569
    %v725 = vadd.f32 %v724, %v570
    %v726 = vadd.f32 %v725, %v571
    %v727 = vadd.f32 %v726, %v572
    %v728 = vadd.f32 %v727, %v573
    %v729 = vadd.f32 %v728, %v574
    %v730 = vadd.f32 %v729, %v575
    %v731 = vadd.f32 %v730, %v576
    %v732 = vadd.f32 %v731, %v577
    %v733 = vadd.f32 %v732, %v578
    %v734 = vadd.f32 %v733, %v579
    %v735 = vadd.f32 %v734, %v580
    %v736 = vadd.f32 %v735, %v581
    %v737 = vadd.f32 %v736, %v582
    %v738 = vadd.f32 %v737, %v583
    %v739 = vadd.f32 %v738, %v584
    %v740 = vadd.f32 %v739, %v585
    %v741 = vadd.f32 %v740, %v586
    %v742 = vadd.f32 %v741, %v587
    %v743 = vadd.f32 %v742, %v588
    %v744 = vadd.f32 %v743, %v589
    %v745 = vadd.f32 %v744, %v590
    %v746 = vadd.f32 %v745, %v591
    %v747 = vadd.f32 %v746, %v592
    %v748 = vadd.f32 %v747, %v593
    %v749 = vadd.f32 %v748, %v594
    %v750 = vadd.f32 %v749, %v595
    %v751 = vadd.f32 %v750, %v596
    %v752 = vadd.f32 %v751, %v597
    %v753 = vadd.f32 %v752, %v598
    %v754 = vadd.f32 %v753, %v599
    %v755 = vadd.f32 %v754, %v600
    %v756 = vadd.f32 %v755, %v601
    %v757 = vadd.f32 %v756, %v602
    %v758 = vadd.f32 %v757, %v603
    %v759 = vadd.f32 %v758, %v604
    %v760 = vadd.f32 %v759, %v605
    %v761 = vadd.f32 %v760, %v606
    %v762 = vadd.f32 %v761, %v607
    %v763 = vadd.f32 %v762, %v608
    %v764 = vadd.f32 %v763, %v609
    %v765 = vadd.f32 %v764, %v610
    %v766 = vadd.f32 %v765, %v611
    %v767 = vadd.f32 %v766, %v612
    %v768 = vadd.f32 %v767, %v613
    %v769 = vadd.f32 %v768, %v614
    %v770 = vadd.f32 %v769, %v615
    %v771 = vadd.f32 %v770, %v616
    %v772 = vadd.f32 %v771, %v617
    %v773 = vadd.f32 %v772, %v618
    %v774 = vadd.f32 %v773, %v619
    %v775 = vadd.f32 %v774, %v620
    %v776 = vadd.f32 %v775, %v621
    %v777 = vadd.f32 %v776, %v622
    %v778 = vadd.f32 %v777, %v623
    %v779 = vadd.f32 %v778, %v624
    %v780 = vadd.f32 %v779, %v625
    %v781 = vadd.f32 %v780, %v626
    %v782 = vadd.f32 %v781, %v627
    %v783 = vadd.f32 %v782, %v628
    %v784 = vadd.f32 %v783, %v629
    %v785 = vadd.f32 %v784, %v630
    %v786 = vadd.f32 %v785, %v631
    %v787 = vadd.f32 %v786, %v632
    %v788 = vadd.f32 %v787, %v633
    %v789 = vadd.f32 %v788, %v634
    %v790 = vadd.f32 %v789, %v635
    %v791 = vadd.f32 %v790, %v636
    %v792 = vadd.f32 %v791, %v637
    %v793 = vadd.f32 %v792, %v638
    %v794 = vadd.f32 %v793, %v639
    %v795 = vadd.f32 %v794, %v640
    %v796 = vadd.f32 %v795, %v641
    %v797 = vadd.f32 %v796, %v642
    %v798 = vadd.f32 %v797, %v643
    %v799 = vadd.f32 %v798, %v644
    %v800 = vadd.f32 %v799, %v645
    %v801 = vadd.f32 %v800, %v646
    %v802 = vadd.f32 %v801, %v647
    %v803 = vadd.f32 %v802, %v648
    %v804 = vadd.f32 %v803, %v649
    %v805 = vadd.f32 %v804, %v650
    %v806 = vadd.f32 %v805, %v651
    %v807 = vadd.f32 %v806, %v652
    %v808 = vadd.f32 %v807, %v653
    %v809 = vadd.f32 %v808, %v654
    %v810 = vadd.f32 %v809, %v655
    %v811 = vadd.f32 %v810, %v656
    %v812 = vadd.f32 %v811, %v657
    %v813 = vadd.f32 %v812, %v658
    %v814 = vadd.f32 %v813, %v659
    %v815 = vadd.f32 %v814, %v660
    %v816 = vadd.f32 %v815, %v661
    %v817 = vadd.f32 %v816, %v662
    %v818 = vadd.f32 %v817, %v663
    %819 = vadd.xlane.f32.xlu0 %v818
    %v820 = vpop.xlane.xlu0 %819
    %v821 = vrot.slane %v820, 4
    %v822 = vadd.f32 %v820, %v821
    %v823 = vrot.slane %v822, 2
    %v824 = vadd.f32 %v822, %v823
    %v825 = vrot.slane %v824, 1
    %v826 = vadd.f32 %v824, %v825
    %s827 = vtos %v826
    %s828 = scalar_lea.smem [#allocation7], 0
    %829 = sst [smem:[%s828]] %s827
    // Predicated region
    $region18: #{tpu_custom_call.1} parent=1 // pred_check
      _
    $region19: #{tpu_custom_call.1} parent=1 // pred_check_branch
      %831 = sbr.rel (0) target = $region21
    $region20: #{tpu_custom_call.1} parent=1 // pred_region
      %s833 = ssub.s32 16, 16
      %834 = vsyncadd [#allocation4], %s833
      %837 = dma.smem_to_hbm [#allocation7], 16, %s2, [#allocation4]
    $region21: #{tpu_custom_call.1} parent=1 // pred_fallthru
      _
    // Predicated region
    $region22: #{tpu_custom_call.1} parent=1 // pred_check
      _
    $region23: #{tpu_custom_call.1} parent=1 // pred_check_branch
      %839 = sbr.rel (0) target = $region25
    $region24: #{tpu_custom_call.1} parent=1 // pred_region
      %840 = dma.done [#allocation4], 16
    $region25: #{tpu_custom_call.1} parent=1 // pred_fallthru
      _
    %841 = sfence
    %842 = vsyncpa [#allocation3], 1
    %843 = vsyncpa [#allocation6], 1
    %844 = vsyncpa [#allocation4], 1

</llo_original>
